<compile_context>
chip_gen: v6e
topology: v6e:2x2x1
jax: 0.10.0
libtpu: 0.0.40
codegen_flags: <defaults>
</compile_context>

<pallas_src>
import jax
import jax.numpy as jnp
from jax import lax
from jax.experimental import pallas as pl
from jax.experimental.pallas import tpu as pltpu


def _make_kernel(out_is_one, cast_to_bf16):
    """Fused concat(=pre-packed)+linear1+ReLU+linear2 kernel."""

    def kernel(x_ref, w1_ref, b1_ref, w2_ref, b2_ref, o_ref):
        x = x_ref[...]
        w1 = w1_ref[...]
        if cast_to_bf16:
            # In-kernel VPU cast; HBM copies stay f32, accumulation stays f32.
            x = x.astype(jnp.bfloat16)
            w1 = w1.astype(jnp.bfloat16)
        # linear1: single dense contraction over the zero-padded concatenated
        # feature axis (one MXU contraction instead of 14 partial matmuls).
        h = jnp.dot(x, w1, preferred_element_type=jnp.float32)
        h = h + b1_ref[...]
        # dropout (eval/inference) is identity.
        h = jnp.maximum(h, 0.0)  # ReLU, f32 on the VPU.

        if out_is_one:
            # linear2 with a 1-wide output, emitted lane-dense as a (1, Bt)
            # row: contract (1, D) with (Bt, D) over D (NT dot_general, the
            # flash-attention q@k^T pattern) -> unmasked lane-dense store.
            o = lax.dot_general(
                w2_ref[...], h,
                dimension_numbers=(((1,), (1,)), ((), ())),
                preferred_element_type=jnp.float32)
            o = o + b2_ref[0]                     # scalar bias from SMEM
        else:
            o = jnp.dot(h, w2_ref[...], preferred_element_type=jnp.float32)
            o = o + b2_ref[...]
        o_ref[...] = o.astype(o_ref.dtype)

    return kernel


def protocol_attention_regression_forward(
        embeddings, w1, b1, w2, b2, *,
        block_b=256,
        gridless_max_batch=4096,
        use_bf16_matmul=True):
    """embeddings: list of 14 [B, f_i] arrays; weights stored as (in, out)."""
    feat_dims = [int(e.shape[1]) for e in embeddings]
    B = int(embeddings[0].shape[0])
    K = sum(feat_dims)
    D = int(w1.shape[1])
    O = int(w2.shape[1])
    assert w1.shape[0] == K, "w1 rows must match total embedding width"

    # Build ONE dense [B, K_pad] input (fuses the 14-way concat) and zero-pad
    # the contraction axis up to a lane-aligned width (499 -> 512).  In a real
    # deployment the w1 zero-padding happens once at weight-load time.
    K_pad = ((K + 127) // 128) * 128
    pieces = list(embeddings)
    if K_pad != K:
        pieces.append(jnp.zeros((B, K_pad - K), dtype=embeddings[0].dtype))
    x = jnp.concatenate(pieces, axis=1)
    w1_pad = jnp.pad(w1, ((0, K_pad - K), (0, 0))) if K_pad != K else w1
    w1_pad = w1_pad.astype(jnp.float32)
    x = x.astype(jnp.float32)

    b1_arg = jnp.reshape(b1, (1, D)).astype(jnp.float32)
    out_is_one = (O == 1)
    if out_is_one:
        w2_arg = jnp.reshape(jnp.transpose(w2), (1, D)).astype(jnp.float32)
        b2_arg = jnp.reshape(b2, (1,)).astype(jnp.float32)      # SMEM scalar
        out_shape = jax.ShapeDtypeStruct((1, B), jnp.float32)   # lane-dense
    else:
        w2_arg = w2.astype(jnp.float32)
        b2_arg = jnp.reshape(b2, (1, O)).astype(jnp.float32)
        out_shape = jax.ShapeDtypeStruct((B, O), jnp.float32)

    kernel = _make_kernel(out_is_one, use_bf16_matmul)
    args = (x, w1_pad, b1_arg, w2_arg, b2_arg)

    cost = pl.CostEstimate(
        flops=2 * B * K_pad * D + 2 * B * D * O,
        transcendentals=0,
        bytes_accessed=4 * (B * K_pad + K_pad * D + D + D * O + O + B * O),
    )

    vmem = pl.BlockSpec(memory_space=pltpu.MemorySpace.VMEM)
    smem = pl.BlockSpec(memory_space=pltpu.MemorySpace.SMEM)

    if B <= gridless_max_batch:
        # Gridless single-shot kernel: no per-step bookkeeping / pipeline DMA
        # setup — this problem is step-overhead bound, not bandwidth bound.
        footprint = 4 * (B * K_pad + K_pad * D + B * D + D + D * O + O + B * O)
        if use_bf16_matmul:
            footprint += 2 * (B * K_pad + K_pad * D)
        compiler_params = None
        if footprint > 12 * 1024 * 1024:
            compiler_params = pltpu.CompilerParams(
                vmem_limit_bytes=min(2 * footprint, 48 * 1024 * 1024))
        in_specs = [vmem, vmem, vmem, vmem, smem if out_is_one else vmem]
        out = pl.pallas_call(
            kernel,
            out_shape=out_shape,
            in_specs=in_specs,
            out_specs=vmem,
            cost_estimate=cost,
            compiler_params=compiler_params,
        )(*args)
    else:
        # Batch-tiled path: one "parallel" grid axis over batch (shards across
        # the two TensorCores on v7x); weights are whole-array resident.
        assert block_b % 128 == 0, "block_b must be a multiple of 128"
        grid = (pl.cdiv(B, block_b),)
        x_spec = pl.BlockSpec((block_b, K_pad), lambda i: (i, 0))
        w1_spec = pl.BlockSpec((K_pad, D), lambda i: (0, 0))
        b1_spec = pl.BlockSpec((1, D), lambda i: (0, 0))
        w2_spec = pl.BlockSpec(w2_arg.shape, lambda i: (0, 0))
        b2_spec = smem if out_is_one else pl.BlockSpec((1, O), lambda i: (0, 0))
        if out_is_one:
            out_spec = pl.BlockSpec((1, block_b), lambda i: (0, i))
        else:
            out_spec = pl.BlockSpec((block_b, O), lambda i: (i, 0))
        out = pl.pallas_call(
            kernel,
            out_shape=out_shape,
            grid=grid,
            in_specs=[x_spec, w1_spec, b1_spec, w2_spec, b2_spec],
            out_specs=out_spec,
            cost_estimate=cost,
            compiler_params=pltpu.CompilerParams(
                dimension_semantics=("parallel",)),
        )(*args)

    if out_is_one:
        out = jnp.reshape(out, (B, 1))
    return out


def _reference(embeddings, w1, b1, w2, b2, *, bf16_matmul):
    """Pure-JAX reference matching the kernel's operand precision."""
    x = jnp.concatenate(embeddings, axis=1)
    if bf16_matmul:
        h = jnp.dot(x.astype(jnp.bfloat16), w1.astype(jnp.bfloat16),
                    preferred_element_type=jnp.float32)
    else:
        h = jnp.dot(x, w1, preferred_element_type=jnp.float32)
    h = jnp.maximum(h + b1, 0.0)
    return jnp.dot(h, w2, preferred_element_type=jnp.float32) + b2


if __name__ == "__main__":
    key = jax.random.PRNGKey(0)

    # Module hyperparameters (small, consistent with __init__):
    sentence_embedding_dim = 48   # divisible by num_heads=6
    linear_output_dim = 1
    batch = 2

    D = sentence_embedding_dim
    # 14 embedding widths summing to 8*D + 5 + 4 + 4 + 2 + 50 + 50 = 499.
    feat_dims = [D, D, D, 5, D, D, D, D, 4, 4, 2, D, 50, 50]
    total_in = sum(feat_dims)
    assert total_in == 8 * D + 5 + 4 + 4 + 2 + 50 + 50

    n_emb = len(feat_dims)
    keys = jax.random.split(key, n_emb + 4)

    embeddings = [
        jax.random.normal(keys[i], (batch, f), dtype=jnp.float32)
        for i, f in enumerate(feat_dims)
    ]

    # Parameters stored as (in, out) — equivalent to torch's x @ W.T + b.
    k_w1, k_b1, k_w2, k_b2 = keys[-4:]
    w1 = jax.random.normal(k_w1, (total_in, D), dtype=jnp.float32) * 0.02
    b1 = jax.random.normal(k_b1, (1, D), dtype=jnp.float32) * 0.02
    w2 = jax.random.normal(k_w2, (D, linear_output_dim), dtype=jnp.float32) * 0.02
    b2 = jax.random.normal(k_b2, (1, linear_output_dim), dtype=jnp.float32) * 0.02

    # 1) Small batch, f32 MXU operands, gridless path (tight tolerance).
    out = protocol_attention_regression_forward(
        embeddings, w1, b1, w2, b2, use_bf16_matmul=False)
    out = jax.block_until_ready(out)
    ref = _reference(embeddings, w1, b1, w2, b2, bf16_matmul=False)
    assert out.shape == (batch, linear_output_dim)
    assert jnp.allclose(out, ref, atol=1e-4, rtol=1e-4)

    # 2) Realistic batch, default bf16 MXU operands, still gridless
    #    (compare against a bf16-operand reference).
    big_batch = 256
    big_keys = jax.random.split(keys[-1], n_emb)
    big_embeddings = [
        jax.random.normal(big_keys[i], (big_batch, f), dtype=jnp.float32)
        for i, f in enumerate(feat_dims)
    ]
    out_big = protocol_attention_regression_forward(
        big_embeddings, w1, b1, w2, b2)
    out_big = jax.block_until_ready(out_big)
    ref_big = _reference(big_embeddings, w1, b1, w2, b2, bf16_matmul=True)
    assert out_big.shape == (big_batch, linear_output_dim)
    assert jnp.allclose(out_big, ref_big, atol=2e-3, rtol=2e-3)

    # 3) Force the batch-tiled ("parallel" grid) path to exercise it.
    tiled_batch = 512
    tiled_keys = jax.random.split(keys[-2], n_emb)
    tiled_embeddings = [
        jax.random.normal(tiled_keys[i], (tiled_batch, f), dtype=jnp.float32)
        for i, f in enumerate(feat_dims)
    ]
    out_t = protocol_attention_regression_forward(
        tiled_embeddings, w1, b1, w2, b2,
        block_b=256, gridless_max_batch=128)
    out_t = jax.block_until_ready(out_t)
    ref_t = _reference(tiled_embeddings, w1, b1, w2, b2, bf16_matmul=True)
    assert out_t.shape == (tiled_batch, linear_output_dim)
    assert jnp.allclose(out_t, ref_t, atol=2e-3, rtol=2e-3)

    print("KERNEL_OK")
</pallas_src>

<mosaic_0001>
module attributes {stable_mosaic.version = 11 : i64} {
  func.func @kernel(%arg0: memref<2x512xf32, #tpu.memory_space<vmem>>, %arg1: memref<512x48xf32, #tpu.memory_space<vmem>>, %arg2: memref<1x48xf32, #tpu.memory_space<vmem>>, %arg3: memref<1x48xf32, #tpu.memory_space<vmem>>, %arg4: memref<1xf32, #tpu.memory_space<smem>>, %arg5: memref<1x2xf32, #tpu.memory_space<vmem>>) attributes {dimension_semantics = [], scalar_prefetch = 0 : i64, scratch_operands = 0 : i64, tpu.core_type = #tpu.core_type<tc>} {
    %c0 = arith.constant 0 : index
    %c0_0 = arith.constant 0 : index
    %0 = vector.load %arg0[%c0, %c0_0] : memref<2x512xf32, #tpu.memory_space<vmem>>, vector<2x512xf32>
    %c0_1 = arith.constant 0 : index
    %c0_2 = arith.constant 0 : index
    %1 = vector.load %arg1[%c0_1, %c0_2] : memref<512x48xf32, #tpu.memory_space<vmem>>, vector<512x48xf32>
    %cst = arith.constant dense<0.000000e+00> : vector<2x48xf32>
    %2 = tpu.matmul %0, %1, %cst {dimension_numbers = #tpu.dot_dimension_numbers<[1], [0], [0], [1], [0, 0, 1, 1], [], []>} : vector<2x512xf32>, vector<512x48xf32>, vector<2x48xf32> -> vector<2x48xf32>
    %c0_3 = arith.constant 0 : index
    %c0_4 = arith.constant 0 : index
    %3 = vector.load %arg2[%c0_3, %c0_4] : memref<1x48xf32, #tpu.memory_space<vmem>>, vector<1x48xf32>
    %4 = vector.broadcast %3 : vector<1x48xf32> to vector<2x48xf32>
    %5 = arith.addf %2, %4 : vector<2x48xf32>
    %cst_5 = arith.constant 0.000000e+00 : f32
    %6 = vector.broadcast %cst_5 : f32 to vector<2x48xf32>
    %7 = arith.maximumf %5, %6 : vector<2x48xf32>
    %c0_6 = arith.constant 0 : index
    %c0_7 = arith.constant 0 : index
    %8 = vector.load %arg3[%c0_6, %c0_7] : memref<1x48xf32, #tpu.memory_space<vmem>>, vector<1x48xf32>
    %cst_8 = arith.constant dense<0.000000e+00> : vector<1x2xf32>
    %9 = tpu.matmul %8, %7, %cst_8 {dimension_numbers = #tpu.dot_dimension_numbers<[1], [1], [0], [0], [0, 0, 1, 0], [], []>} : vector<1x48xf32>, vector<2x48xf32>, vector<1x2xf32> -> vector<1x2xf32>
    %c0_9 = arith.constant 0 : index
    %10 = memref.load %arg4[%c0_9] : memref<1xf32, #tpu.memory_space<smem>>
    %11 = vector.broadcast %10 : f32 to vector<1x2xf32>
    %12 = arith.addf %9, %11 : vector<1x2xf32>
    %c0_10 = arith.constant 0 : index
    %c0_11 = arith.constant 0 : index
    %13 = vector.load %arg5[%c0_10, %c0_11] : memref<1x2xf32, #tpu.memory_space<vmem>>, vector<1x2xf32>
    tpu.vector_store %arg5[%c0_10, %c0_11], %12 {strides = array<i32>} : memref<1x2xf32, #tpu.memory_space<vmem>>, vector<1x2xf32>,
    return
  }
}

</mosaic_0001>

<llo_original>
// kernel: tpu_custom_call.1
$region0: #{tpu_custom_call.1}
  #allocation0 [shape = 'u32[]', space=smem, size = 0x4, offset = 0x4, fixed_abs, tag = 'smem constant byte address 0x4 - core index']
  #allocation1 [shape = 'u32[144,128]{1,0:T(1,128)}', space=vmem, size = 0x12000, scoped, tag = 'internal scratch']
  #allocation2 [shape = 'f32[1]{0:T(128)S(6)}', space=smem, size = 0x200, scoped, tag = 'scoped memory for tpu_custom_call.1']
  %s0 = inlined_call_operand.vmem [shape: f32[2,512], index: 0, kind: input, shape index: {}]
  %s1 = inlined_call_operand.vmem [shape: f32[512,48], index: 1, kind: input, shape index: {}]
  %s2 = inlined_call_operand.vmem [shape: f32[1,48], index: 2, kind: input, shape index: {}]
  %s3 = inlined_call_operand.vmem [shape: f32[1,48], index: 3, kind: input, shape index: {}]
  %s4 = inlined_call_operand.<no memory space> [shape: f32[1], index: 4, kind: input, shape index: {}]
  %s5 = inlined_call_operand.hbm [shape: f32[1,2], index: 5, kind: output, shape index: {}]
  %s6 = sld [smem:[#allocation0]]
  $region30: #{tpu_custom_call.1} parent=0
    _
  %s8 = ssub.s32 1, %s6
  %s9 = scalar_select 0, %s8, %s6
  %10 = sst [smem:[#allocation2]] %s4
  $region1: #{tpu_custom_call.1} parent=0
    #allocation3 [shape = 'u8[512]{0}', space=vmem, size = 0x400, scoped, tag = 'output window, operand 0, single buffered']
    #allocation4 [shape = 's32[1]{0}', space=sflag, size = 0x4, scoped, tag = 'scoped memory for tpu_custom_call.1']
    %11 = vsyncpa [#allocation4], 0
    // Predicated region
    $region2: #{tpu_custom_call.1} parent=1 // pred_check
      _
    $region3: #{tpu_custom_call.1} parent=1 // pred_check_branch
      %13 = sbr.rel (0) target = $region5
    $region4: #{tpu_custom_call.1} parent=1 // pred_region
      _
    $region5: #{tpu_custom_call.1} parent=1 // pred_fallthru
      _
    // Predicated region
    $region6: #{tpu_custom_call.1} parent=1 // pred_check
      _
    $region7: #{tpu_custom_call.1} parent=1 // pred_check_branch
      %15 = sbr.rel (0) target = $region9
    $region8: #{tpu_custom_call.1} parent=1 // pred_region
      _
    $region9: #{tpu_custom_call.1} parent=1 // pred_fallthru
      _
    // Predicated region
    $region10: #{tpu_custom_call.1} parent=1 // pred_check
      _
    $region11: #{tpu_custom_call.1} parent=1 // pred_check_branch
      %17 = sbr.rel (0) target = $region13
    $region12: #{tpu_custom_call.1} parent=1 // pred_region
      _
    $region13: #{tpu_custom_call.1} parent=1 // pred_fallthru
      _
    // Predicated region
    $region14: #{tpu_custom_call.1} parent=1 // pred_check
      _
    $region15: #{tpu_custom_call.1} parent=1 // pred_check_branch
      %19 = sbr.rel (0) target = $region17
    $region16: #{tpu_custom_call.1} parent=1 // pred_region
      _
    $region17: #{tpu_custom_call.1} parent=1 // pred_fallthru
      _
    // Predicated region
    $region18: #{tpu_custom_call.1} parent=1 // pred_check
      _
    $region19: #{tpu_custom_call.1} parent=1 // pred_check_branch
      %21 = sbr.rel (0) target = $region21
    $region20: #{tpu_custom_call.1} parent=1 // pred_region
      _
    $region21: #{tpu_custom_call.1} parent=1 // pred_fallthru
      _
    %v22 = vld [vmem:[%s0] sm:$0xff]
    %v23 = vld [vmem:[%s1] sm:$0xff]
    %v24 = vld [vmem:[%s1 + $0x8] sm:$0xff]
    %v25 = vld [vmem:[%s1 + $0x10] sm:$0xff]
    %v26 = vld [vmem:[%s1 + $0x18] sm:$0xff]
    %v27 = vld [vmem:[%s1 + $0x20] sm:$0xff]
    %v28 = vld [vmem:[%s1 + $0x28] sm:$0xff]
    %v29 = vld [vmem:[%s1 + $0x30] sm:$0xff]
    %v30 = vld [vmem:[%s1 + $0x38] sm:$0xff]
    %v31 = vld [vmem:[%s1 + $0x40] sm:$0xff]
    %v32 = vld [vmem:[%s1 + $0x48] sm:$0xff]
    %v33 = vld [vmem:[%s1 + $0x50] sm:$0xff]
    %v34 = vld [vmem:[%s1 + $0x58] sm:$0xff]
    %v35 = vld [vmem:[%s1 + $0x60] sm:$0xff]
    %v36 = vld [vmem:[%s1 + $0x68] sm:$0xff]
    %v37 = vld [vmem:[%s1 + $0x70] sm:$0xff]
    %v38 = vld [vmem:[%s1 + $0x78] sm:$0xff]
    %v39 = vld [vmem:[%s1 + $0x80] sm:$0xff]
    %v40 = vld [vmem:[%s1 + $0x88] sm:$0xff]
    %v41 = vld [vmem:[%s1 + $0x90] sm:$0xff]
    %v42 = vld [vmem:[%s1 + $0x98] sm:$0xff]
    %v43 = vld [vmem:[%s1 + $0xa0] sm:$0xff]
    %v44 = vld [vmem:[%s1 + $0xa8] sm:$0xff]
    %v45 = vld [vmem:[%s1 + $0xb0] sm:$0xff]
    %v46 = vld [vmem:[%s1 + $0xb8] sm:$0xff]
    %v47 = vld [vmem:[%s1 + $0xc0] sm:$0xff]
    %v48 = vld [vmem:[%s1 + $0xc8] sm:$0xff]
    %v49 = vld [vmem:[%s1 + $0xd0] sm:$0xff]
    %v50 = vld [vmem:[%s1 + $0xd8] sm:$0xff]
    %v51 = vld [vmem:[%s1 + $0xe0] sm:$0xff]
    %v52 = vld [vmem:[%s1 + $0xe8] sm:$0xff]
    %v53 = vld [vmem:[%s1 + $0xf0] sm:$0xff]
    %v54 = vld [vmem:[%s1 + $0xf8] sm:$0xff]
    %v55 = vld [vmem:[%s1 + $0x100] sm:$0xff]
    %v56 = vld [vmem:[%s1 + $0x108] sm:$0xff]
    %v57 = vld [vmem:[%s1 + $0x110] sm:$0xff]
    %v58 = vld [vmem:[%s1 + $0x118] sm:$0xff]
    %v59 = vld [vmem:[%s1 + $0x120] sm:$0xff]
    %v60 = vld [vmem:[%s1 + $0x128] sm:$0xff]
    %v61 = vld [vmem:[%s1 + $0x130] sm:$0xff]
    %v62 = vld [vmem:[%s1 + $0x138] sm:$0xff]
    %v63 = vld [vmem:[%s1 + $0x140] sm:$0xff]
    %v64 = vld [vmem:[%s1 + $0x148] sm:$0xff]
    %v65 = vld [vmem:[%s1 + $0x150] sm:$0xff]
    %v66 = vld [vmem:[%s1 + $0x158] sm:$0xff]
    %v67 = vld [vmem:[%s1 + $0x160] sm:$0xff]
    %v68 = vld [vmem:[%s1 + $0x168] sm:$0xff]
    %v69 = vld [vmem:[%s1 + $0x170] sm:$0xff]
    %v70 = vld [vmem:[%s1 + $0x178] sm:$0xff]
    %v71 = vld [vmem:[%s1 + $0x180] sm:$0xff]
    %v72 = vld [vmem:[%s1 + $0x188] sm:$0xff]
    %v73 = vld [vmem:[%s1 + $0x190] sm:$0xff]
    %v74 = vld [vmem:[%s1 + $0x198] sm:$0xff]
    %v75 = vld [vmem:[%s1 + $0x1a0] sm:$0xff]
    %v76 = vld [vmem:[%s1 + $0x1a8] sm:$0xff]
    %v77 = vld [vmem:[%s1 + $0x1b0] sm:$0xff]
    %v78 = vld [vmem:[%s1 + $0x1b8] sm:$0xff]
    %v79 = vld [vmem:[%s1 + $0x1c0] sm:$0xff]
    %v80 = vld [vmem:[%s1 + $0x1c8] sm:$0xff]
    %v81 = vld [vmem:[%s1 + $0x1d0] sm:$0xff]
    %v82 = vld [vmem:[%s1 + $0x1d8] sm:$0xff]
    %v83 = vld [vmem:[%s1 + $0x1e0] sm:$0xff]
    %v84 = vld [vmem:[%s1 + $0x1e8] sm:$0xff]
    %v85 = vld [vmem:[%s1 + $0x1f0] sm:$0xff]
    %v86 = vld [vmem:[%s1 + $0x1f8] sm:$0xff]
    %v87 = vld [vmem:[%s2] sm:$0x1]
    %v89 = vlaneseq
    %v90 = vshrl.u32 %v89, 7
    %v91 = vsub.s32 0, %v90
    %v92 = vrot.slane %v87, %v91
    %v95 = vcombine.high %v22, %v22
    %v97 = vunpack.c.l.s4 1983009808
    %v98 = vunpack.c.0.s8 %v97
    %v99 = vlaneseq
    %v100 = vshrl.u32 %v99, 7
    %v101 = vsub.s32 %v98, %v100
    %v102 = vrot.slane %v22, %v101
    %v104 = vunpack.c.l.s4 1983009808
    %v105 = vunpack.c.0.s8 %v104
    %v106 = vlaneseq
    %v107 = vshrl.u32 %v106, 7
    %v108 = vsub.s32 %v105, %v107
    %v109 = vrot.slane %v95, %v108
    %v110 = vcombine.high %v102, %v102
    %v111 = vcombine.high %v109, %v109
    %116 = vmatprep.subr.mxu0 0.0
    %117 = vmatpush1.msra.mxu0 %v38
    %118 = vmatprep.subr.mxu0 0.0
    %119 = vmatpush1.msra.mxu0 %v37
    %120 = vmatprep.subr.mxu0 0.0
    %121 = vmatpush1.msra.mxu0 %v36
    %122 = vmatprep.subr.mxu0 0.0
    %123 = vmatpush1.msra.mxu0 %v35
    %124 = vmatprep.subr.mxu0 0.0
    %125 = vmatpush1.msra.mxu0 %v34
    %126 = vmatprep.subr.mxu0 0.0
    %127 = vmatpush1.msra.mxu0 %v33
    %128 = vmatprep.subr.mxu0 0.0
    %129 = vmatpush1.msra.mxu0 %v32
    %130 = vmatprep.subr.mxu0 0.0
    %131 = vmatpush1.msra.mxu0 %v31
    %132 = vmatprep.subr.mxu0 0.0
    %133 = vmatpush1.msra.mxu0 %v30
    %134 = vmatprep.subr.mxu0 0.0
    %135 = vmatpush1.msra.mxu0 %v29
    %136 = vmatprep.subr.mxu0 0.0
    %137 = vmatpush1.msra.mxu0 %v28
    %138 = vmatprep.subr.mxu0 0.0
    %139 = vmatpush1.msra.mxu0 %v27
    %140 = vmatprep.subr.mxu0 0.0
    %141 = vmatpush1.msra.mxu0 %v26
    %142 = vmatprep.subr.mxu0 0.0
    %143 = vmatpush1.msra.mxu0 %v25
    %144 = vmatprep.subr.mxu0 0.0
    %145 = vmatpush1.msra.mxu0 %v24
    %146 = vmatprep.subr.mxu0 0.0
    %147 = vmatpush1.msra.mxu0 %v23
    %148 = vmatprep.subr.mxu0 0.0
    %149 = vmatpush2.msra.mxu0 %v54
    %150 = vmatprep.subr.mxu0 0.0
    %151 = vmatpush2.msra.mxu0 %v53
    %152 = vmatprep.subr.mxu0 0.0
    %153 = vmatpush2.msra.mxu0 %v52
    %154 = vmatprep.subr.mxu0 0.0
    %155 = vmatpush2.msra.mxu0 %v51
    %156 = vmatprep.subr.mxu0 0.0
    %157 = vmatpush2.msra.mxu0 %v50
    %158 = vmatprep.subr.mxu0 0.0
    %159 = vmatpush2.msra.mxu0 %v49
    %160 = vmatprep.subr.mxu0 0.0
    %161 = vmatpush2.msra.mxu0 %v48
    %162 = vmatprep.subr.mxu0 0.0
    %163 = vmatpush2.msra.mxu0 %v47
    %164 = vmatprep.subr.mxu0 0.0
    %165 = vmatpush2.msra.mxu0 %v46
    %166 = vmatprep.subr.mxu0 0.0
    %167 = vmatpush2.msra.mxu0 %v45
    %168 = vmatprep.subr.mxu0 0.0
    %169 = vmatpush2.msra.mxu0 %v44
    %170 = vmatprep.subr.mxu0 0.0
    %171 = vmatpush2.msra.mxu0 %v43
    %172 = vmatprep.subr.mxu0 0.0
    %173 = vmatpush2.msra.mxu0 %v42
    %174 = vmatprep.subr.mxu0 0.0
    %175 = vmatpush2.msra.mxu0 %v41
    %176 = vmatprep.subr.mxu0 0.0
    %177 = vmatpush2.msra.mxu0 %v40
    %178 = vmatprep.subr.mxu0 0.0
    %179 = vmatpush2.msra.mxu0 %v39
    %180 = vmatprep.mubr.f32.mxu0 %v110
    %181 = vmatmul.mubr.f32.gmra.mxu0 %v102
    %v182 = vpop.f32.mrf.mxu0
    %v183 = vadd.f32 %v92, %v182
    %v184 = vpop.f32.mrf.mxu0
    %185 = vdwg.mxu0
    %186 = vmatprep.subr.mxu0 0.0
    %187 = vmatpush1.msra.mxu0 %v70
    %188 = vmatprep.subr.mxu0 0.0
    %189 = vmatpush1.msra.mxu0 %v69
    %190 = vmatprep.subr.mxu0 0.0
    %191 = vmatpush1.msra.mxu0 %v68
    %192 = vmatprep.subr.mxu0 0.0
    %193 = vmatpush1.msra.mxu0 %v67
    %194 = vmatprep.subr.mxu0 0.0
    %195 = vmatpush1.msra.mxu0 %v66
    %196 = vmatprep.subr.mxu0 0.0
    %197 = vmatpush1.msra.mxu0 %v65
    %198 = vmatprep.subr.mxu0 0.0
    %199 = vmatpush1.msra.mxu0 %v64
    %200 = vmatprep.subr.mxu0 0.0
    %201 = vmatpush1.msra.mxu0 %v63
    %202 = vmatprep.subr.mxu0 0.0
    %203 = vmatpush1.msra.mxu0 %v62
    %204 = vmatprep.subr.mxu0 0.0
    %205 = vmatpush1.msra.mxu0 %v61
    %206 = vmatprep.subr.mxu0 0.0
    %207 = vmatpush1.msra.mxu0 %v60
    %208 = vmatprep.subr.mxu0 0.0
    %209 = vmatpush1.msra.mxu0 %v59
    %210 = vmatprep.subr.mxu0 0.0
    %211 = vmatpush1.msra.mxu0 %v58
    %212 = vmatprep.subr.mxu0 0.0
    %213 = vmatpush1.msra.mxu0 %v57
    %214 = vmatprep.subr.mxu0 0.0
    %215 = vmatpush1.msra.mxu0 %v56
    %216 = vmatprep.subr.mxu0 0.0
    %217 = vmatpush1.msra.mxu0 %v55
    %218 = vmatprep.subr.mxu0 0.0
    %219 = vmatpush2.msra.mxu0 %v86
    %220 = vmatprep.subr.mxu0 0.0
    %221 = vmatpush2.msra.mxu0 %v85
    %222 = vmatprep.subr.mxu0 0.0
    %223 = vmatpush2.msra.mxu0 %v84
    %224 = vmatprep.subr.mxu0 0.0
    %225 = vmatpush2.msra.mxu0 %v83
    %226 = vmatprep.subr.mxu0 0.0
    %227 = vmatpush2.msra.mxu0 %v82
    %228 = vmatprep.subr.mxu0 0.0
    %229 = vmatpush2.msra.mxu0 %v81
    %230 = vmatprep.subr.mxu0 0.0
    %231 = vmatpush2.msra.mxu0 %v80
    %232 = vmatprep.subr.mxu0 0.0
    %233 = vmatpush2.msra.mxu0 %v79
    %234 = vmatprep.subr.mxu0 0.0
    %235 = vmatpush2.msra.mxu0 %v78
    %236 = vmatprep.subr.mxu0 0.0
    %237 = vmatpush2.msra.mxu0 %v77
    %238 = vmatprep.subr.mxu0 0.0
    %239 = vmatpush2.msra.mxu0 %v76
    %240 = vmatprep.subr.mxu0 0.0
    %241 = vmatpush2.msra.mxu0 %v75
    %242 = vmatprep.subr.mxu0 0.0
    %243 = vmatpush2.msra.mxu0 %v74
    %244 = vmatprep.subr.mxu0 0.0
    %245 = vmatpush2.msra.mxu0 %v73
    %246 = vmatprep.subr.mxu0 0.0
    %247 = vmatpush2.msra.mxu0 %v72
    %248 = vmatprep.subr.mxu0 0.0
    %249 = vmatpush2.msra.mxu0 %v71
    %250 = vmatprep.mubr.f32.mxu0 %v111
    %251 = vmatmul.mubr.f32.gmra.mxu0 %v109
    %v252 = vpop.f32.mrf.mxu0
    %v253 = vadd.f32 %v183, %v252
    %v254 = vpop.f32.mrf.mxu0
    %255 = vdwg.mxu0
    %v256 = vmax.f32 %v253, 0.0
    %v257 = vld [vmem:[%s3] sm:$0x1]
    %s258 = sld [smem:[#allocation2]]
    %v259 = vstv %s258
    %vm260 = vcmask 392192
    %v262 = vsel %vm260, %v257, 0
    %v265 = vsel %vm260, %v256, 0
    %267 = vmatprep.subr.mxu0 0.0
    %268 = vmatpush1.xpose.msra.mxu0 0.0
    %269 = vmatprep.subr.mxu0 0.0
    %270 = vmatpush1.xpose.msra.mxu0 0.0
    %271 = vmatprep.subr.mxu0 0.0
    %272 = vmatpush1.xpose.msra.mxu0 0.0
    %273 = vmatprep.subr.mxu0 0.0
    %274 = vmatpush1.xpose.msra.mxu0 0.0
    %275 = vmatprep.subr.mxu0 0.0
    %276 = vmatpush1.xpose.msra.mxu0 0.0
    %277 = vmatprep.subr.mxu0 0.0
    %278 = vmatpush1.xpose.msra.mxu0 0.0
    %279 = vmatprep.subr.mxu0 0.0
    %280 = vmatpush1.xpose.msra.mxu0 0.0
    %281 = vmatprep.subr.mxu0 0.0
    %282 = vmatpush1.xpose.msra.mxu0 0.0
    %283 = vmatprep.subr.mxu0 0.0
    %284 = vmatpush1.xpose.msra.mxu0 0.0
    %285 = vmatprep.subr.mxu0 0.0
    %286 = vmatpush1.xpose.msra.mxu0 0.0
    %287 = vmatprep.subr.mxu0 0.0
    %288 = vmatpush1.xpose.msra.mxu0 0.0
    %289 = vmatprep.subr.mxu0 0.0
    %290 = vmatpush1.xpose.msra.mxu0 0.0
    %291 = vmatprep.subr.mxu0 0.0
    %292 = vmatpush1.xpose.msra.mxu0 0.0
    %293 = vmatprep.subr.mxu0 0.0
    %294 = vmatpush1.xpose.msra.mxu0 0.0
    %295 = vmatprep.subr.mxu0 0.0
    %296 = vmatpush1.xpose.msra.mxu0 0.0
    %297 = vmatprep.subr.mxu0 0.0
    %298 = vmatpush1.xpose.msra.mxu0 %v265
    %299 = vmatprep.subr.mxu0 0.0
    %300 = vmatpush2.xpose.msra.mxu0 0.0
    %301 = vmatprep.subr.mxu0 0.0
    %302 = vmatpush2.xpose.msra.mxu0 0.0
    %303 = vmatprep.subr.mxu0 0.0
    %304 = vmatpush2.xpose.msra.mxu0 0.0
    %305 = vmatprep.subr.mxu0 0.0
    %306 = vmatpush2.xpose.msra.mxu0 0.0
    %307 = vmatprep.subr.mxu0 0.0
    %308 = vmatpush2.xpose.msra.mxu0 0.0
    %309 = vmatprep.subr.mxu0 0.0
    %310 = vmatpush2.xpose.msra.mxu0 0.0
    %311 = vmatprep.subr.mxu0 0.0
    %312 = vmatpush2.xpose.msra.mxu0 0.0
    %313 = vmatprep.subr.mxu0 0.0
    %314 = vmatpush2.xpose.msra.mxu0 0.0
    %315 = vmatprep.subr.mxu0 0.0
    %316 = vmatpush2.xpose.msra.mxu0 0.0
    %317 = vmatprep.subr.mxu0 0.0
    %318 = vmatpush2.xpose.msra.mxu0 0.0
    %319 = vmatprep.subr.mxu0 0.0
    %320 = vmatpush2.xpose.msra.mxu0 0.0
    %321 = vmatprep.subr.mxu0 0.0
    %322 = vmatpush2.xpose.msra.mxu0 0.0
    %323 = vmatprep.subr.mxu0 0.0
    %324 = vmatpush2.xpose.msra.mxu0 0.0
    %325 = vmatprep.subr.mxu0 0.0
    %326 = vmatpush2.xpose.msra.mxu0 0.0
    %327 = vmatprep.subr.mxu0 0.0
    %328 = vmatpush2.xpose.msra.mxu0 0.0
    %329 = vmatprep.subr.mxu0 0.0
    %330 = vmatpush2.xpose.msra.mxu0 0.0
    %331 = vmatprep.mubr.f32.mxu0 0.0
    %332 = vmatmul.mubr.f32.gmra.mxu0 %v262
    %v333 = vpop.f32.mrf.mxu0
    %v334 = vadd.f32 %v259, %v333
    %v335 = vpop.f32.mrf.mxu0
    %336 = vdwg.mxu0
    %vm337 = vcmask 8192
    %338 = vst.msk [vmem:[#allocation3] sm:$0x1] %vm337, %v334
    // Predicated region
    $region22: #{tpu_custom_call.1} parent=1 // pred_check
      _
    $region23: #{tpu_custom_call.1} parent=1 // pred_check_branch
      %340 = sbr.rel (0) target = $region25
    $region24: #{tpu_custom_call.1} parent=1 // pred_region
      %s342 = ssub.s32 16, 16
      %343 = vsyncadd [#allocation4], %s342
      %s345 = sshll.u32 [#allocation3], 4
      %s346 = int_to_ptr.vmem [resolvable:$true] %s345
      %348 = dma.vmem_to_hbm [thread:$0]  %s346, 16, %s5, [#allocation4]
    $region25: #{tpu_custom_call.1} parent=1 // pred_fallthru
      _
    // Predicated region
    $region26: #{tpu_custom_call.1} parent=1 // pred_check
      _
    $region27: #{tpu_custom_call.1} parent=1 // pred_check_branch
      %350 = sbr.rel (0) target = $region29
    $region28: #{tpu_custom_call.1} parent=1 // pred_region
      %351 = dma.done [#allocation4], 16
    $region29: #{tpu_custom_call.1} parent=1 // pred_fallthru
      _
    %352 = vsyncpa [#allocation4], 1

</llo_original>
